<compile_context>
chip_gen: v7x
topology: tpu7x:2x2x1
jax: 0.10.0
libtpu: 0.0.40
codegen_flags: <defaults>
</compile_context>

<pallas_src>
import jax
import jax.numpy as jnp
from jax import lax
import numpy as np
from jax.experimental import pallas as pl
from jax.experimental.pallas import tpu as pltpu


# ----------------------------------------------------------------------------
# Kernel
# ----------------------------------------------------------------------------
def _sep_conv_kernel(x_ref, w_ref, shift_ref, o_ref):
    # x_ref:     (TH+2, W+2, Cin)   bf16 padded halo row band
    # w_ref:     (9*Cin, Cout_pad)  bf16 composed dw * pw * bn_scale weights
    # shift_ref: (1, Cout_pad)      f32 folded bias + BN shift
    # o_ref:     (TH*W, Cout_pad)   lane-aligned output slab
    TH = x_ref.shape[0] - 2
    W = x_ref.shape[1] - 2
    Cin = x_ref.shape[2]

    # im2col: 9 shifted views concatenated along channels -> (TH*W, 9*Cin).
    taps = [x_ref[ky:ky + TH, kx:kx + W, :]
            for ky in range(3) for kx in range(3)]
    lhs = jnp.concatenate(taps, axis=2).reshape(TH * W, 9 * Cin)

    # One big-K matmul; accumulation stays inside the MXU (f32).
    acc = jnp.dot(lhs, w_ref[...], preferred_element_type=jnp.float32)

    # Single VPU add epilogue; unmasked full-lane store (Cout_pad % 128 == 0).
    o_ref[...] = (acc + shift_ref[...]).astype(o_ref.dtype)


# ----------------------------------------------------------------------------
# Tiling helpers
# ----------------------------------------------------------------------------
def _round_up(v, m):
    return -(-v // m) * m


def _vmem_capacity_bytes():
    try:
        return int(pltpu.get_tpu_info().vmem_capacity_bytes)
    except Exception:
        return 64 * 1024 * 1024   # conservative fallback (v7x per-TC VMEM)


def _choose_tile_h(H, W, Cin, Cout_pad, out_itemsize, budget_bytes):
    """Largest TH (multiple of 8, needed for the output block) whose
    double-buffered input/output blocks, the double-buffered weight/shift
    blocks, and the in-kernel im2col + f32 accumulator temporaries fit the
    given budget."""
    cap = _round_up(max(H, 1), 8)
    # weight + shift blocks (double-buffered by the pipeline even though the
    # index map is constant) -- this was missing from the previous budget.
    fixed = 2 * (9 * Cin * Cout_pad * 2) + 2 * (Cout_pad * 4)
    best = 8
    th = 8
    while th <= cap:
        in_blk = (th + 2) * (W + 2) * Cin * 2                       # bf16 band
        out_blk = th * W * Cout_pad * out_itemsize
        tmp = th * W * (9 * Cin * 2                                  # im2col (bf16)
                        + Cout_pad * 4                               # f32 acc
                        + Cout_pad * out_itemsize)                   # cast temp
        if fixed + 2 * in_blk + 2 * out_blk + tmp <= budget_bytes:
            best = th
        else:
            break
        th += 8
    return min(best, cap)


# ----------------------------------------------------------------------------
# Wrappers
# ----------------------------------------------------------------------------
def separable_conv_block_nhwc(x_nhwc, dw_w, pw_w, pw_b, bn_gamma, bn_beta,
                              bn_mean, bn_var, eps=1e-3, tile_h=None):
    """SeparableConvBlock forward on NHWC input (eval-mode BN, no activation).

    x_nhwc: (N, H, W, Cin)
    dw_w:   (Cin, 1, 3, 3)      depthwise Conv2d weight (groups=Cin, no bias)
    pw_w:   (Cout, Cin, 1, 1)   pointwise Conv2d weight
    pw_b:   (Cout,)             pointwise Conv2d bias
    bn_*:   (Cout,)             BatchNorm2d affine params / running stats
    Returns (N, H, W, Cout).
    """
    N, H, W, Cin = x_nhwc.shape
    Cout = pw_w.shape[0]
    Cout_pad = _round_up(Cout, 128)
    out_dtype = x_nhwc.dtype
    out_itemsize = jnp.dtype(out_dtype).itemsize

    # --- fold dw * pw * bn_scale into one (9*Cin, Cout_pad) weight and
    #     bias + BN shift into a single f32 shift (folds done in f32) ---
    dw = jnp.transpose(dw_w.reshape(Cin, 3, 3).astype(jnp.float32), (1, 2, 0))   # (3,3,Cin)
    pw = jnp.transpose(pw_w.reshape(Cout, Cin).astype(jnp.float32), (1, 0))      # (Cin,Cout)
    scale = (bn_gamma.astype(jnp.float32)
             / jnp.sqrt(bn_var.astype(jnp.float32) + eps))                       # (Cout,)
    shift = (bn_beta.astype(jnp.float32)
             - bn_mean.astype(jnp.float32) * scale
             + pw_b.astype(jnp.float32) * scale)                                 # (Cout,)
    w9 = (dw[:, :, :, None] * pw[None, None, :, :]
          * scale[None, None, None, :]).reshape(9 * Cin, Cout)
    w9 = jnp.pad(w9, ((0, 0), (0, Cout_pad - Cout))).astype(jnp.bfloat16)        # (9*Cin,Cp)
    shift2 = jnp.pad(shift, (0, Cout_pad - Cout)).reshape(1, Cout_pad)           # f32

    # --- generation-aware VMEM budget & spatial tile size ---
    vmem_cap = _vmem_capacity_bytes()
    vmem_limit = vmem_cap * 3 // 4            # 96 MiB on 128 MiB parts, 48 MiB on v7x
    budget = int(vmem_cap * 0.35)

    if tile_h is None:
        TH = _choose_tile_h(H, W, Cin, Cout_pad, out_itemsize, budget)
        nH = -(-H // TH)
        # v7x has 2 TensorCores sharing the ("parallel","parallel") grid;
        # make sure both get work even at batch size 1.
        while N * nH < 2 and TH > 8:
            TH -= 8
            nH = -(-H // TH)
    else:
        TH = min(_round_up(tile_h, 8), _round_up(H, 8))
        nH = -(-H // TH)
    Hp = nH * TH

    # --- bf16 cast, SAME pad, overlapping halo row bands (fused gather) ---
    x_bf = x_nhwc.astype(jnp.bfloat16)
    x_pad = jnp.pad(x_bf, ((0, 0), (1, Hp - H + 1), (1, 1), (0, 0)))             # (N,Hp+2,W+2,Cin)
    row_idx = jnp.arange(nH)[:, None] * TH + jnp.arange(TH + 2)[None, :]         # (nH,TH+2)
    x_bands = x_pad[:, row_idx]                                                  # (N,nH,TH+2,W+2,Cin)

    out = pl.pallas_call(
        _sep_conv_kernel,
        out_shape=jax.ShapeDtypeStruct((N, Hp * W, Cout_pad), out_dtype),
        grid_spec=pltpu.PrefetchScalarGridSpec(
            num_scalar_prefetch=0,
            grid=(N, nH),
            in_specs=[
                pl.BlockSpec((None, None, TH + 2, W + 2, Cin),
                             lambda n, t: (n, t, 0, 0, 0)),
                pl.BlockSpec((9 * Cin, Cout_pad), lambda n, t: (0, 0)),
                pl.BlockSpec((1, Cout_pad), lambda n, t: (0, 0)),
            ],
            out_specs=pl.BlockSpec((None, TH * W, Cout_pad),
                                   lambda n, t: (n, t, 0)),
        ),
        compiler_params=pltpu.CompilerParams(
            dimension_semantics=("parallel", "parallel"),
            vmem_limit_bytes=vmem_limit),
    )(x_bands, w9, shift2)

    out = out.reshape(N, Hp, W, Cout_pad)[:, :H, :, :Cout]
    return out


def separable_conv_block(x_nchw, dw_w, pw_w, pw_b, bn_gamma, bn_beta,
                         bn_mean, bn_var, eps=1e-3, tile_h=None):
    """PyTorch-layout entry point: (N, Cin, H, W) in, (N, Cout, H, W) out.
    A surrounding NHWC graph should call separable_conv_block_nhwc directly
    and skip both transposes."""
    x_nhwc = jnp.transpose(x_nchw, (0, 2, 3, 1))
    y = separable_conv_block_nhwc(x_nhwc, dw_w, pw_w, pw_b, bn_gamma, bn_beta,
                                  bn_mean, bn_var, eps=eps, tile_h=tile_h)
    return jnp.transpose(y, (0, 3, 1, 2))


# ----------------------------------------------------------------------------
# Pure-JAX reference (f32, lax convs) for correctness checking
# ----------------------------------------------------------------------------
def _reference(x_nchw, dw_w, pw_w, pw_b, bn_gamma, bn_beta, bn_mean, bn_var,
               eps=1e-3):
    N, Cin, H, W = x_nchw.shape
    Cout = pw_w.shape[0]
    x = jnp.transpose(x_nchw, (0, 2, 3, 1)).astype(jnp.float32)
    dw_hwio = jnp.transpose(dw_w.astype(jnp.float32), (2, 3, 1, 0))   # (3,3,1,Cin)
    y = lax.conv_general_dilated(
        x, dw_hwio, window_strides=(1, 1), padding="SAME",
        dimension_numbers=("NHWC", "HWIO", "NHWC"), feature_group_count=Cin)
    pw_hwio = jnp.transpose(pw_w.astype(jnp.float32).reshape(Cout, Cin),
                            (1, 0)).reshape(1, 1, Cin, Cout)
    y = lax.conv_general_dilated(
        y, pw_hwio, window_strides=(1, 1), padding="VALID",
        dimension_numbers=("NHWC", "HWIO", "NHWC"))
    y = y + pw_b.astype(jnp.float32)
    scale = bn_gamma.astype(jnp.float32) / jnp.sqrt(bn_var.astype(jnp.float32) + eps)
    y = y * scale + (bn_beta.astype(jnp.float32) - bn_mean.astype(jnp.float32) * scale)
    return jnp.transpose(y, (0, 3, 1, 2)).astype(x_nchw.dtype)


if __name__ == "__main__":
    key = jax.random.PRNGKey(0)
    k_x, k_dw, k_pw, k_pb, k_g, k_b, k_m, k_v = jax.random.split(key, 8)

    N, Cin, H, W = 2, 4, 16, 16
    Cout = Cin  # module default: out_channels=None -> in_channels

    x = jax.random.normal(k_x, (N, Cin, H, W), jnp.float32)
    # depthwise_conv: Conv2d(Cin, Cin, k=3, groups=Cin, bias=False)
    dw_w = jax.random.normal(k_dw, (Cin, 1, 3, 3), jnp.float32) * 0.2
    # pointwise_conv: Conv2d(Cin, Cout, k=1, bias=True)
    pw_w = jax.random.normal(k_pw, (Cout, Cin, 1, 1), jnp.float32) * 0.2
    pw_b = jax.random.normal(k_pb, (Cout,), jnp.float32) * 0.1
    # BatchNorm2d(Cout, eps=1e-3) affine params / running stats.
    bn_gamma = 1.0 + 0.1 * jax.random.normal(k_g, (Cout,), jnp.float32)
    bn_beta = 0.1 * jax.random.normal(k_b, (Cout,), jnp.float32)
    bn_mean = 0.05 * jax.random.normal(k_m, (Cout,), jnp.float32)
    bn_var = jnp.abs(1.0 + 0.1 * jax.random.normal(k_v, (Cout,), jnp.float32))

    ref = _reference(x, dw_w, pw_w, pw_b, bn_gamma, bn_beta, bn_mean, bn_var)

    # Multi-tile path (2 spatial tiles per image; exercises the halo bands).
    out_tiled = separable_conv_block(x, dw_w, pw_w, pw_b, bn_gamma, bn_beta,
                                     bn_mean, bn_var, tile_h=8)
    out_tiled = jax.block_until_ready(out_tiled)
    # bf16 activations/weights (f32 accumulation) -> loosened tolerances.
    np.testing.assert_allclose(np.asarray(out_tiled), np.asarray(ref),
                               rtol=2e-2, atol=2e-2)

    # Auto-chosen tile (single row band per image at these shapes).
    out_auto = separable_conv_block(x, dw_w, pw_w, pw_b, bn_gamma, bn_beta,
                                    bn_mean, bn_var)
    out_auto = jax.block_until_ready(out_auto)
    np.testing.assert_allclose(np.asarray(out_auto), np.asarray(ref),
                               rtol=2e-2, atol=2e-2)

    assert out_tiled.shape == (N, Cout, H, W)
    assert out_auto.shape == (N, Cout, H, W)
    print("KERNEL_OK")
</pallas_src>

<mosaic_0001>
module attributes {stable_mosaic.version = 11 : i64} {
  func.func @_sep_conv_kernel(%arg0: i32, %arg1: i32, %arg2: memref<1x1x10x18x4xbf16, #tpu.memory_space<vmem>>, %arg3: memref<36x128xbf16, #tpu.memory_space<vmem>>, %arg4: memref<1x128xf32, #tpu.memory_space<vmem>>, %arg5: memref<1x128x128xf32, #tpu.memory_space<vmem>>) attributes {dimension_semantics = [#tpu.dimension_semantics<parallel>, #tpu.dimension_semantics<parallel>], iteration_bounds = array<i64: 2, 2>, scalar_prefetch = 0 : i64, scratch_operands = 0 : i64, tpu.core_type = #tpu.core_type<tc>, window_params = [{transform_indices = @transform_0, window_bounds = array<i64: 1, 1, 10, 18, 4>}, {pipeline_mode = #tpu.pipeline_mode<synchronous>, transform_indices = @transform_1, window_bounds = array<i64: 36, 128>}, {pipeline_mode = #tpu.pipeline_mode<synchronous>, transform_indices = @transform_2, window_bounds = array<i64: 1, 128>}, {transform_indices = @transform_3, window_bounds = array<i64: 1, 128, 128>}]} {
    %c0 = arith.constant 0 : index
    %c0_0 = arith.constant 0 : index
    %c0_1 = arith.constant 0 : index
    %c0_2 = arith.constant 0 : index
    %c0_3 = arith.constant 0 : index
    %0 = vector.load %arg2[%c0, %c0_0, %c0_1, %c0_2, %c0_3] : memref<1x1x10x18x4xbf16, #tpu.memory_space<vmem>>, vector<1x1x8x16x4xbf16>
    %1 = vector.shape_cast %0 : vector<1x1x8x16x4xbf16> to vector<8x16x4xbf16>
    %c0_4 = arith.constant 0 : index
    %c0_5 = arith.constant 0 : index
    %c0_6 = arith.constant 0 : index
    %c1 = arith.constant 1 : index
    %c0_7 = arith.constant 0 : index
    %2 = vector.load %arg2[%c0_4, %c0_5, %c0_6, %c1, %c0_7] : memref<1x1x10x18x4xbf16, #tpu.memory_space<vmem>>, vector<1x1x8x16x4xbf16>
    %3 = vector.shape_cast %2 : vector<1x1x8x16x4xbf16> to vector<8x16x4xbf16>
    %c0_8 = arith.constant 0 : index
    %c0_9 = arith.constant 0 : index
    %c0_10 = arith.constant 0 : index
    %c2 = arith.constant 2 : index
    %c0_11 = arith.constant 0 : index
    %4 = vector.load %arg2[%c0_8, %c0_9, %c0_10, %c2, %c0_11] : memref<1x1x10x18x4xbf16, #tpu.memory_space<vmem>>, vector<1x1x8x16x4xbf16>
    %5 = vector.shape_cast %4 : vector<1x1x8x16x4xbf16> to vector<8x16x4xbf16>
    %c0_12 = arith.constant 0 : index
    %c0_13 = arith.constant 0 : index
    %c1_14 = arith.constant 1 : index
    %c0_15 = arith.constant 0 : index
    %c0_16 = arith.constant 0 : index
    %6 = vector.load %arg2[%c0_12, %c0_13, %c1_14, %c0_15, %c0_16] : memref<1x1x10x18x4xbf16, #tpu.memory_space<vmem>>, vector<1x1x8x16x4xbf16>
    %7 = vector.shape_cast %6 : vector<1x1x8x16x4xbf16> to vector<8x16x4xbf16>
    %c0_17 = arith.constant 0 : index
    %c0_18 = arith.constant 0 : index
    %c1_19 = arith.constant 1 : index
    %c1_20 = arith.constant 1 : index
    %c0_21 = arith.constant 0 : index
    %8 = vector.load %arg2[%c0_17, %c0_18, %c1_19, %c1_20, %c0_21] : memref<1x1x10x18x4xbf16, #tpu.memory_space<vmem>>, vector<1x1x8x16x4xbf16>
    %9 = vector.shape_cast %8 : vector<1x1x8x16x4xbf16> to vector<8x16x4xbf16>
    %c0_22 = arith.constant 0 : index
    %c0_23 = arith.constant 0 : index
    %c1_24 = arith.constant 1 : index
    %c2_25 = arith.constant 2 : index
    %c0_26 = arith.constant 0 : index
    %10 = vector.load %arg2[%c0_22, %c0_23, %c1_24, %c2_25, %c0_26] : memref<1x1x10x18x4xbf16, #tpu.memory_space<vmem>>, vector<1x1x8x16x4xbf16>
    %11 = vector.shape_cast %10 : vector<1x1x8x16x4xbf16> to vector<8x16x4xbf16>
    %c0_27 = arith.constant 0 : index
    %c0_28 = arith.constant 0 : index
    %c2_29 = arith.constant 2 : index
    %c0_30 = arith.constant 0 : index
    %c0_31 = arith.constant 0 : index
    %12 = vector.load %arg2[%c0_27, %c0_28, %c2_29, %c0_30, %c0_31] : memref<1x1x10x18x4xbf16, #tpu.memory_space<vmem>>, vector<1x1x8x16x4xbf16>
    %13 = vector.shape_cast %12 : vector<1x1x8x16x4xbf16> to vector<8x16x4xbf16>
    %c0_32 = arith.constant 0 : index
    %c0_33 = arith.constant 0 : index
    %c2_34 = arith.constant 2 : index
    %c1_35 = arith.constant 1 : index
    %c0_36 = arith.constant 0 : index
    %14 = vector.load %arg2[%c0_32, %c0_33, %c2_34, %c1_35, %c0_36] : memref<1x1x10x18x4xbf16, #tpu.memory_space<vmem>>, vector<1x1x8x16x4xbf16>
    %15 = vector.shape_cast %14 : vector<1x1x8x16x4xbf16> to vector<8x16x4xbf16>
    %c0_37 = arith.constant 0 : index
    %c0_38 = arith.constant 0 : index
    %c2_39 = arith.constant 2 : index
    %c2_40 = arith.constant 2 : index
    %c0_41 = arith.constant 0 : index
    %16 = vector.load %arg2[%c0_37, %c0_38, %c2_39, %c2_40, %c0_41] : memref<1x1x10x18x4xbf16, #tpu.memory_space<vmem>>, vector<1x1x8x16x4xbf16>
    %17 = vector.shape_cast %16 : vector<1x1x8x16x4xbf16> to vector<8x16x4xbf16>
    %18 = tpu.concatenate %1, %3, %5, %7, %9, %11, %13, %15, %17 in 2 : vector<8x16x4xbf16>, vector<8x16x4xbf16>, vector<8x16x4xbf16>, vector<8x16x4xbf16>, vector<8x16x4xbf16>, vector<8x16x4xbf16>, vector<8x16x4xbf16>, vector<8x16x4xbf16>, vector<8x16x4xbf16> -> vector<8x16x36xbf16>
    %19 = vector.shape_cast %18 : vector<8x16x36xbf16> to vector<128x36xbf16>
    %c0_42 = arith.constant 0 : index
    %c0_43 = arith.constant 0 : index
    %20 = vector.load %arg3[%c0_42, %c0_43] : memref<36x128xbf16, #tpu.memory_space<vmem>>, vector<36x128xbf16>
    %cst = arith.constant dense<0.000000e+00> : vector<128x128xf32>
    %21 = tpu.matmul %19, %20, %cst {dimension_numbers = #tpu.dot_dimension_numbers<[1], [0], [0], [1], [0, 0, 1, 1], [], []>} : vector<128x36xbf16>, vector<36x128xbf16>, vector<128x128xf32> -> vector<128x128xf32>
    %c0_44 = arith.constant 0 : index
    %c0_45 = arith.constant 0 : index
    %22 = vector.load %arg4[%c0_44, %c0_45] : memref<1x128xf32, #tpu.memory_space<vmem>>, vector<1x128xf32>
    %23 = vector.broadcast %22 : vector<1x128xf32> to vector<128x128xf32>
    %24 = arith.addf %21, %23 : vector<128x128xf32>
    %c0_46 = arith.constant 0 : index
    %c0_47 = arith.constant 0 : index
    %c0_48 = arith.constant 0 : index
    %25 = vector.load %arg5[%c0_46, %c0_47, %c0_48] : memref<1x128x128xf32, #tpu.memory_space<vmem>>, vector<1x128x128xf32>
    %26 = vector.shape_cast %25 : vector<1x128x128xf32> to vector<128x128xf32>
    %27 = vector.shape_cast %24 : vector<128x128xf32> to vector<1x128x128xf32>
    tpu.vector_store %arg5[%c0_46, %c0_47, %c0_48], %27 {strides = array<i32>} : memref<1x128x128xf32, #tpu.memory_space<vmem>>, vector<1x128x128xf32>,
    return
  }
  func.func @transform_0(%arg0: i32, %arg1: i32) -> (i32, i32, i32, i32, i32) {
    %c0_i32 = arith.constant 0 : i32
    %c0_i32_0 = arith.constant 0 : i32
    %c0_i32_1 = arith.constant 0 : i32
    %c0_i32_2 = arith.constant 0 : i32
    return %arg0, %arg1, %c0_i32, %c0_i32_0, %c0_i32_1 : i32, i32, i32, i32, i32
  }
  func.func @transform_1(%arg0: i32, %arg1: i32) -> (i32, i32) {
    %c0_i32 = arith.constant 0 : i32
    %c0_i32_0 = arith.constant 0 : i32
    %c0_i32_1 = arith.constant 0 : i32
    return %c0_i32, %c0_i32_0 : i32, i32
  }
  func.func @transform_2(%arg0: i32, %arg1: i32) -> (i32, i32) {
    %c0_i32 = arith.constant 0 : i32
    %c0_i32_0 = arith.constant 0 : i32
    %c0_i32_1 = arith.constant 0 : i32
    return %c0_i32, %c0_i32_0 : i32, i32
  }
  func.func @transform_3(%arg0: i32, %arg1: i32) -> (i32, i32, i32) {
    %c0_i32 = arith.constant 0 : i32
    %c0_i32_0 = arith.constant 0 : i32
    return %arg0, %arg1, %c0_i32 : i32, i32, i32
  }
}

</mosaic_0001>

<llo_original>
// kernel: tpu_custom_call.1
$region0: #{tpu_custom_call.1}
  #allocation0 [shape = 'u32[]', space=smem, size = 0x4, offset = 0x4, fixed_abs, tag = 'smem constant byte address 0x4 - core index']
  #allocation1 [shape = 'u32[144,128]{1,0:T(1,128)}', space=vmem, size = 0x12000, scoped, tag = 'internal scratch']
  %s0 = inlined_call_operand.vmem [shape: bf16[2,2,10,18,4], index: 0, kind: input, shape index: {}]
  %s1 = inlined_call_operand.vmem [shape: bf16[36,128], index: 1, kind: input, shape index: {}]
  %s2 = inlined_call_operand.vmem [shape: f32[1,128], index: 2, kind: input, shape index: {}]
  %s3 = inlined_call_operand.hbm [shape: f32[2,256,128], index: 3, kind: output, shape index: {}]
  %s4 = sld [smem:[#allocation0]]
  $region45: #{tpu_custom_call.1} parent=0
    _
  %s6 = ssub.s32 1, %s4
  %s7 = scalar_select 0, %s6, %s4
  $region1: #{tpu_custom_call.1} parent=0
    #allocation2 [shape = 'u8[131072]{0}', space=vmem, size = 0x20000, scoped, tag = 'output window, operand 0']
    #allocation3 [shape = 's32[2]{0}', space=sflag, size = 0x8, scoped, tag = 'scoped memory for tpu_custom_call.1']
    %8 = vsyncpa [#allocation3], 0
    %s9 = scalar_lea.sflag [#allocation3], 1
    %10 = vsyncpa %s9, 0
    loop: start=0, step=1, limit=6
    $region2: #{tpu_custom_call.1} parent=1 // loop_pre_header
      _
    $region3: #{tpu_custom_call.1} parent=1 // loop_header
      %s12 = sphi 0, %s16
      %p13 = scmp.ge.s32.totalorder %s12, 6
      %s19 = sphi 0, %s31
      %s20 = sphi 0, %s27
      %s21 = sphi 0, %s19
      %s22 = sphi 0, %s20
      %s23 = sphi 0, %s21
      %s24 = sphi 0, %s22
      %s36 = sphi 0, %s38
      %s39 = sphi 0, %s36
      %s40 = sphi 0, %s39
      %s56 = sphi 0, %s40
      %s60 = sphi 0, %s60
      %s62 = sphi 0, %s60
      %s63 = sphi 0, %s62
      %s77 = sphi 0, %s63
      %s81 = sphi 0, %s81
      %s83 = sphi 0, %s81
      %s84 = sphi 0, %s83
      %s98 = sphi 0, %s84
      %s106 = sphi 0, %s108
      %s109 = sphi 0, %s106
      %s110 = sphi 0, %s109
      %s126 = sphi 0, %s110
    $region4: #{tpu_custom_call.1} parent=1 // loop_header_branch
      %15 = sbr.rel (%p13) target = $region8
    $region5: #{tpu_custom_call.1} parent=1 // loop_body
      %s17 = ssub.s32 %s12, 1
      %s18 = ssub.s32 %s12, 2
      %s25 = sadd.s32 1, %s20
      %p26 = scmp.ge.s32.totalorder %s25, 2
      %s27 = scalar_select %p26, 0, %s25
      %s28 = sadd.s32 1, %s19
      %s29 = scalar_select %p26, %s28, %s19
      %p30 = scmp.ge.s32.totalorder %s29, 2
      %s31 = scalar_select %p30, 0, %s29
      %s32 = ssub.s32 %s19, %s31
      %s33 = ssub.s32 %s20, %s27
      %s34 = sor.u32 %s32, %s33
      %p35 = scmp.eq.s32.totalorder %s34, 0
      %s37 = sadd.s32 %s36, 1
      %s38 = scalar_select %p35, %s36, %s37
      %p41 = pneg %p35
      %p42 = scmp.eq.s32.totalorder %s12, 3
      %p43 = por %p41, %p42
      %p44 = scmp.ne.s32.totalorder %s36, %s39
      %p45 = scmp.eq.s32.totalorder %s12, 0
      %p46 = por %p44, %p45
      %p47 = scmp.ne.s32.totalorder %s36, %s39
      %p48 = scmp.eq.s32.totalorder %s17, 3
      %p49 = por %p47, %p48
      %p50 = scmp.ne.s32.totalorder %s39, %s40
      %p51 = scmp.eq.s32.totalorder %s17, 0
      %p52 = por %p50, %p51
      %p53 = scmp.ne.s32.totalorder %s39, %s40
      %p54 = scmp.eq.s32.totalorder %s18, 3
      %p55 = por %p53, %p54
      %p57 = scmp.ne.s32.totalorder %s40, %s56
      %p58 = scmp.eq.s32.totalorder %s18, 0
      %p59 = por %p57, %p58
      %s61 = sadd.s32 %s60, 1
      %p64 = scmp.eq.s32.totalorder %s12, 3
      %p65 = scmp.ne.s32.totalorder %s60, %s62
      %p66 = scmp.eq.s32.totalorder %s12, 0
      %p67 = por %p65, %p66
      %p68 = scmp.ne.s32.totalorder %s60, %s62
      %p69 = scmp.eq.s32.totalorder %s17, 3
      %p70 = por %p68, %p69
      %p71 = scmp.ne.s32.totalorder %s62, %s63
      %p72 = scmp.eq.s32.totalorder %s17, 0
      %p73 = por %p71, %p72
      %p74 = scmp.ne.s32.totalorder %s62, %s63
      %p75 = scmp.eq.s32.totalorder %s18, 3
      %p76 = por %p74, %p75
      %p78 = scmp.ne.s32.totalorder %s63, %s77
      %p79 = scmp.eq.s32.totalorder %s18, 0
      %p80 = por %p78, %p79
      %s82 = sadd.s32 %s81, 1
      %p85 = scmp.eq.s32.totalorder %s12, 3
      %p86 = scmp.ne.s32.totalorder %s81, %s83
      %p87 = scmp.eq.s32.totalorder %s12, 0
      %p88 = por %p86, %p87
      %p89 = scmp.ne.s32.totalorder %s81, %s83
      %p90 = scmp.eq.s32.totalorder %s17, 3
      %p91 = por %p89, %p90
      %p92 = scmp.ne.s32.totalorder %s83, %s84
      %p93 = scmp.eq.s32.totalorder %s17, 0
      %p94 = por %p92, %p93
      %p95 = scmp.ne.s32.totalorder %s83, %s84
      %p96 = scmp.eq.s32.totalorder %s18, 3
      %p97 = por %p95, %p96
      %p99 = scmp.ne.s32.totalorder %s84, %s98
      %p100 = scmp.eq.s32.totalorder %s18, 0
      %p101 = por %p99, %p100
      %s102 = ssub.s32 %s19, %s31
      %s103 = ssub.s32 %s20, %s27
      %s104 = sor.u32 %s102, %s103
      %p105 = scmp.eq.s32.totalorder %s104, 0
      %s107 = sadd.s32 %s106, 1
      %s108 = scalar_select %p105, %s106, %s107
      %p111 = pneg %p105
      %p112 = scmp.eq.s32.totalorder %s12, 3
      %p113 = por %p111, %p112
      %p114 = scmp.ne.s32.totalorder %s106, %s109
      %p115 = scmp.eq.s32.totalorder %s12, 0
      %p116 = por %p114, %p115
      %p117 = scmp.ne.s32.totalorder %s106, %s109
      %p118 = scmp.eq.s32.totalorder %s17, 3
      %p119 = por %p117, %p118
      %p120 = scmp.ne.s32.totalorder %s109, %s110
      %p121 = scmp.eq.s32.totalorder %s17, 0
      %p122 = por %p120, %p121
      %p123 = scmp.ne.s32.totalorder %s109, %s110
      %p124 = scmp.eq.s32.totalorder %s18, 3
      %p125 = por %p123, %p124
      %p127 = scmp.ne.s32.totalorder %s110, %s126
      %p128 = scmp.eq.s32.totalorder %s18, 0
      %p129 = por %p127, %p128
      %p130 = scmp.le.s32.totalorder 1, %s12
      %p131 = scmp.lt.s32.totalorder %s12, 5
      %p132 = pnand %p130, %p131
      %p133 = pneg %p132
      // Predicated region
      $region9: #{tpu_custom_call.1} parent=5 // pred_check
        _
      $region10: #{tpu_custom_call.1} parent=5 // pred_check_branch
        %135 = sbr.rel (%p132) target = $region12
      $region11: #{tpu_custom_call.1} parent=5 // pred_region
        %s136 = ssub.s32 %s12, 1
        // Predicated region
        $region13: #{tpu_custom_call.1} parent=11 // pred_check
          %p137 = pneg %p73
        $region14: #{tpu_custom_call.1} parent=11 // pred_check_branch
          %139 = sbr.rel (%p137) target = $region16
        $region15: #{tpu_custom_call.1} parent=11 // pred_region
          _
        $region16: #{tpu_custom_call.1} parent=11 // pred_fallthru
          _
        // Predicated region
        $region17: #{tpu_custom_call.1} parent=11 // pred_check
          %p140 = pneg %p94
        $region18: #{tpu_custom_call.1} parent=11 // pred_check_branch
          %142 = sbr.rel (%p140) target = $region20
        $region19: #{tpu_custom_call.1} parent=11 // pred_region
          _
        $region20: #{tpu_custom_call.1} parent=11 // pred_fallthru
          _
      $region12: #{tpu_custom_call.1} parent=5 // pred_fallthru
        _
      %p143 = scmp.lt.s32.totalorder %s12, 4
      // Predicated region
      $region21: #{tpu_custom_call.1} parent=5 // pred_check
        %p144 = pneg %p143
      $region22: #{tpu_custom_call.1} parent=5 // pred_check_branch
        %146 = sbr.rel (%p144) target = $region24
      $region23: #{tpu_custom_call.1} parent=5 // pred_region
        // Predicated region
        $region25: #{tpu_custom_call.1} parent=23 // pred_check
          %p147 = pneg %p46
        $region26: #{tpu_custom_call.1} parent=23 // pred_check_branch
          %149 = sbr.rel (%p147) target = $region28
        $region27: #{tpu_custom_call.1} parent=23 // pred_region
          %p150 = scmp.lt.s32.totalorder %s19, 1
          %s151 = scalar_select %p150, %s19, 1
          %p152 = scmp.lt.s32.totalorder %s20, 1
          %s153 = scalar_select %p152, %s20, 1
          %s154 = smul.addr %s153, 30
          %s155 = smul.addr %s151, 60
          %s156 = sadd.s32 %s154, %s155
          %s157 = smul.addr %s156, 4
          %s158 = scalar_lea.vmem %s0, %s157
        $region28: #{tpu_custom_call.1} parent=23 // pred_fallthru
          _
      $region24: #{tpu_custom_call.1} parent=5 // pred_fallthru
        _
      %p159 = scmp.le.s32.totalorder 1, %s12
      %p160 = scmp.lt.s32.totalorder %s12, 5
      %p161 = pnand %p159, %p160
      %p162 = pneg %p161
      // Predicated region
      $region29: #{tpu_custom_call.1} parent=5 // pred_check
        _
      $region30: #{tpu_custom_call.1} parent=5 // pred_check_branch
        %164 = sbr.rel (%p161) target = $region32
      $region31: #{tpu_custom_call.1} parent=5 // pred_region
        %s165 = ssub.s32 %s12, 1
        %p166 = scmp.lt.s32.totalorder %s21, 1
        %s167 = scalar_select %p166, %s21, 1
        %p168 = scmp.lt.s32.totalorder %s22, 1
        %s169 = scalar_select %p168, %s22, 1
        %s170 = smul.addr %s169, 30
        %s171 = smul.addr %s167, 60
        %s172 = sadd.s32 %s170, %s171
        %s173 = smul.addr %s172, 4
        %s174 = scalar_lea.vmem %s0, %s173
        %p175 = pneg %p52
        %p176 = pneg %p49
        %p177 = pneg %p73
        %p178 = pneg %p70
        %p179 = pneg %p94
        %p180 = pneg %p91
        %p181 = pneg %p122
        %p182 = pneg %p119
        %s183 = sand.u32 %s109, 1
        %s184 = scalar_lea.sflag [#allocation3], %s183
        %s185 = sand.u32 %s109, 1
        %s186 = smul.addr %s185, 128
        %s187 = scalar_lea.vmem [#allocation2], %s186
        %p188 = scmp.lt.s32.totalorder %s21, 1
        %s189 = scalar_select %p188, %s21, 1
        %p190 = scmp.lt.s32.totalorder %s22, 1
        %s191 = scalar_select %p190, %s22, 1
        %s192 = smul.addr %s191, 30
        %s193 = smul.addr %s189, 60
        %s194 = sadd.s32 %s192, %s193
        %s195 = smul.addr %s194, 4
        %s196 = scalar_lea.vmem %s0, %s195
        %s197 = smul.u32 16, %s22
        %v199 = vld [vmem:[%s196] sm:$0xf]
        %v200 = vld [vmem:[%s196 + $0x4] sm:$0xf]
        %v201 = vld [vmem:[%s196 + $0xc] sm:$0xf]
        %v202 = vld [vmem:[%s196 + $0x10] sm:$0xf]
        %v203 = vld [vmem:[%s196 + $0x18] sm:$0xf]
        %v204 = vld [vmem:[%s196 + $0x1c] sm:$0xf]
        %v205 = vld [vmem:[%s196 + $0x24] sm:$0xf]
        %v206 = vld [vmem:[%s196 + $0x28] sm:$0xf]
        %v207 = vld [vmem:[%s196 + $0x30] sm:$0xf]
        %v208 = vld [vmem:[%s196 + $0x34] sm:$0xf]
        %v209 = vld [vmem:[%s196 + $0x3c] sm:$0xf]
        %v210 = vld [vmem:[%s196 + $0x40] sm:$0xf]
        %v211 = vld [vmem:[%s196 + $0x48] sm:$0xf]
        %v212 = vld [vmem:[%s196 + $0x4c] sm:$0xf]
        %v213 = vld [vmem:[%s196 + $0x54] sm:$0xf]
        %v214 = vld [vmem:[%s196 + $0x58] sm:$0xf]
        %v215 = vld [vmem:[%s196 + $0x8] sm:$0x1]
        %v216 = vld [vmem:[%s196 + $0x14] sm:$0x1]
        %v217 = vld [vmem:[%s196 + $0x20] sm:$0x1]
        %v218 = vld [vmem:[%s196 + $0x2c] sm:$0x1]
        %v219 = vld [vmem:[%s196 + $0x38] sm:$0x1]
        %v220 = vld [vmem:[%s196 + $0x44] sm:$0x1]
        %v221 = vld [vmem:[%s196 + $0x50] sm:$0x1]
        %v222 = vld [vmem:[%s196 + $0x5c] sm:$0x1]
        %v223 = vld [vmem:[%s196] sm:$0xe]
        %v224 = vld [vmem:[%s196 + $0xc] sm:$0xe]
        %v225 = vld [vmem:[%s196 + $0x18] sm:$0xe]
        %v226 = vld [vmem:[%s196 + $0x24] sm:$0xe]
        %v227 = vld [vmem:[%s196 + $0x30] sm:$0xe]
        %v228 = vld [vmem:[%s196 + $0x3c] sm:$0xe]
        %v229 = vld [vmem:[%s196 + $0x48] sm:$0xe]
        %v230 = vld [vmem:[%s196 + $0x54] sm:$0xe]
        %s231 = scalar_lea.vmem %s196, 12
        %v232 = vld [vmem:[%s231] sm:$0xf]
        %v233 = vld [vmem:[%s231 + $0x4] sm:$0xf]
        %v234 = vld [vmem:[%s231 + $0xc] sm:$0xf]
        %v235 = vld [vmem:[%s231 + $0x10] sm:$0xf]
        %v236 = vld [vmem:[%s231 + $0x18] sm:$0xf]
        %v237 = vld [vmem:[%s231 + $0x1c] sm:$0xf]
        %v238 = vld [vmem:[%s231 + $0x24] sm:$0xf]
        %v239 = vld [vmem:[%s231 + $0x28] sm:$0xf]
        %v240 = vld [vmem:[%s231 + $0x30] sm:$0xf]
        %v241 = vld [vmem:[%s231 + $0x34] sm:$0xf]
        %v242 = vld [vmem:[%s231 + $0x3c] sm:$0xf]
        %v243 = vld [vmem:[%s231 + $0x40] sm:$0xf]
        %v244 = vld [vmem:[%s231 + $0x48] sm:$0xf]
        %v245 = vld [vmem:[%s231 + $0x4c] sm:$0xf]
        %v246 = vld [vmem:[%s231 + $0x54] sm:$0xf]
        %v247 = vld [vmem:[%s231 + $0x58] sm:$0xf]
        %v248 = vld [vmem:[%s231 + $0x8] sm:$0x1]
        %v249 = vld [vmem:[%s231 + $0x14] sm:$0x1]
        %v250 = vld [vmem:[%s231 + $0x20] sm:$0x1]
        %v251 = vld [vmem:[%s231 + $0x2c] sm:$0x1]
        %v252 = vld [vmem:[%s231 + $0x38] sm:$0x1]
        %v253 = vld [vmem:[%s231 + $0x44] sm:$0x1]
        %v254 = vld [vmem:[%s231 + $0x50] sm:$0x1]
        %v255 = vld [vmem:[%s231 + $0x5c] sm:$0x1]
        %v256 = vld [vmem:[%s231] sm:$0xe]
        %v257 = vld [vmem:[%s231 + $0xc] sm:$0xe]
        %v258 = vld [vmem:[%s231 + $0x18] sm:$0xe]
        %v259 = vld [vmem:[%s231 + $0x24] sm:$0xe]
        %v260 = vld [vmem:[%s231 + $0x30] sm:$0xe]
        %v261 = vld [vmem:[%s231 + $0x3c] sm:$0xe]
        %v262 = vld [vmem:[%s231 + $0x48] sm:$0xe]
        %v263 = vld [vmem:[%s231 + $0x54] sm:$0xe]
        %s264 = scalar_lea.vmem %s196, 24
        %v265 = vld [vmem:[%s264] sm:$0xf]
        %v266 = vld [vmem:[%s264 + $0x4] sm:$0xf]
        %v267 = vld [vmem:[%s264 + $0xc] sm:$0xf]
        %v268 = vld [vmem:[%s264 + $0x10] sm:$0xf]
        %v269 = vld [vmem:[%s264 + $0x18] sm:$0xf]
        %v270 = vld [vmem:[%s264 + $0x1c] sm:$0xf]
        %v271 = vld [vmem:[%s264 + $0x24] sm:$0xf]
        %v272 = vld [vmem:[%s264 + $0x28] sm:$0xf]
        %v273 = vld [vmem:[%s264 + $0x30] sm:$0xf]
        %v274 = vld [vmem:[%s264 + $0x34] sm:$0xf]
        %v275 = vld [vmem:[%s264 + $0x3c] sm:$0xf]
        %v276 = vld [vmem:[%s264 + $0x40] sm:$0xf]
        %v277 = vld [vmem:[%s264 + $0x48] sm:$0xf]
        %v278 = vld [vmem:[%s264 + $0x4c] sm:$0xf]
        %v279 = vld [vmem:[%s264 + $0x54] sm:$0xf]
        %v280 = vld [vmem:[%s264 + $0x58] sm:$0xf]
        %v281 = vld [vmem:[%s264 + $0x8] sm:$0x1]
        %v282 = vld [vmem:[%s264 + $0x14] sm:$0x1]
        %v283 = vld [vmem:[%s264 + $0x20] sm:$0x1]
        %v284 = vld [vmem:[%s264 + $0x2c] sm:$0x1]
        %v285 = vld [vmem:[%s264 + $0x38] sm:$0x1]
        %v286 = vld [vmem:[%s264 + $0x44] sm:$0x1]
        %v287 = vld [vmem:[%s264 + $0x50] sm:$0x1]
        %v288 = vld [vmem:[%s264 + $0x5c] sm:$0x1]
        %v289 = vld [vmem:[%s264] sm:$0xe]
        %v290 = vld [vmem:[%s264 + $0xc] sm:$0xe]
        %v291 = vld [vmem:[%s264 + $0x18] sm:$0xe]
        %v292 = vld [vmem:[%s264 + $0x24] sm:$0xe]
        %v293 = vld [vmem:[%s264 + $0x30] sm:$0xe]
        %v294 = vld [vmem:[%s264 + $0x3c] sm:$0xe]
        %v295 = vld [vmem:[%s264 + $0x48] sm:$0xe]
        %v296 = vld [vmem:[%s264 + $0x54] sm:$0xe]
        %v313 = vunpack.c.l.b16 %v199
        %v314 = vunpack.c.l.b16 %v200
        %v315 = vunpack.c.l.b16 %v201
        %v316 = vunpack.c.l.b16 %v202
        %v317 = vunpack.c.l.b16 %v203
        %v318 = vunpack.c.l.b16 %v204
        %v319 = vunpack.c.l.b16 %v205
        %v320 = vunpack.c.l.b16 %v206
        %v321 = vunpack.c.l.b16 %v207
        %v322 = vunpack.c.l.b16 %v208
        %v323 = vunpack.c.l.b16 %v209
        %v324 = vunpack.c.l.b16 %v210
        %v325 = vunpack.c.l.b16 %v211
        %v326 = vunpack.c.l.b16 %v212
        %v327 = vunpack.c.l.b16 %v213
        %v328 = vunpack.c.l.b16 %v214
        %v329 = vpack.c.b16 %v314, %v313
        %v330 = vpack.c.b16 %v316, %v315
        %v331 = vpack.c.b16 %v318, %v317
        %v332 = vpack.c.b16 %v320, %v319
        %v333 = vpack.c.b16 %v322, %v321
        %v334 = vpack.c.b16 %v324, %v323
        %v335 = vpack.c.b16 %v326, %v325
        %v336 = vpack.c.b16 %v328, %v327
        %v345 = vunpack.c.l.b16 %v215
        %v346 = vunpack.c.l.b16 %v216
        %v347 = vunpack.c.l.b16 %v217
        %v348 = vunpack.c.l.b16 %v218
        %v349 = vunpack.c.l.b16 %v219
        %v350 = vunpack.c.l.b16 %v220
        %v351 = vunpack.c.l.b16 %v221
        %v352 = vunpack.c.l.b16 %v222
        %v353 = vpack.c.b16 %v345, %v345
        %v354 = vpack.c.b16 %v346, %v346
        %v355 = vpack.c.b16 %v347, %v347
        %v356 = vpack.c.b16 %v348, %v348
        %v357 = vpack.c.b16 %v349, %v349
        %v358 = vpack.c.b16 %v350, %v350
        %v359 = vpack.c.b16 %v351, %v351
        %v360 = vpack.c.b16 %v352, %v352
        %vm361 = vsmask.f32 7424
        %v363 = vshrl.u32 %v329, 16
        %v365 = vshll.u32 %v329, 16
        %v367 = vrot.slane %v365, 1
        %v368 = vor.u32 %v363, %v367
        %v370 = vshll.u32 %v353, 16
        %v372 = vrot.slane %v370, 1
        %v373 = vsel %vm361, %v368, %v372
        %v375 = vshrl.u32 %v330, 16
        %v377 = vshll.u32 %v330, 16
        %v379 = vrot.slane %v377, 1
        %v380 = vor.u32 %v375, %v379
        %v382 = vshll.u32 %v354, 16
        %v384 = vrot.slane %v382, 1
        %v385 = vsel %vm361, %v380, %v384
        %v387 = vshrl.u32 %v331, 16
        %v389 = vshll.u32 %v331, 16
        %v391 = vrot.slane %v389, 1
        %v392 = vor.u32 %v387, %v391
        %v394 = vshll.u32 %v355, 16
        %v396 = vrot.slane %v394, 1
        %v397 = vsel %vm361, %v392, %v396
        %v399 = vshrl.u32 %v332, 16
        %v401 = vshll.u32 %v332, 16
        %v403 = vrot.slane %v401, 1
        %v404 = vor.u32 %v399, %v403
        %v406 = vshll.u32 %v356, 16
        %v408 = vrot.slane %v406, 1
        %v409 = vsel %vm361, %v404, %v408
        %v411 = vshrl.u32 %v333, 16
        %v413 = vshll.u32 %v333, 16
        %v415 = vrot.slane %v413, 1
        %v416 = vor.u32 %v411, %v415
        %v418 = vshll.u32 %v357, 16
        %v420 = vrot.slane %v418, 1
        %v421 = vsel %vm361, %v416, %v420
        %v423 = vshrl.u32 %v334, 16
        %v425 = vshll.u32 %v334, 16
        %v427 = vrot.slane %v425, 1
        %v428 = vor.u32 %v423, %v427
        %v430 = vshll.u32 %v358, 16
        %v432 = vrot.slane %v430, 1
        %v433 = vsel %vm361, %v428, %v432
        %v435 = vshrl.u32 %v335, 16
        %v437 = vshll.u32 %v335, 16
        %v439 = vrot.slane %v437, 1
        %v440 = vor.u32 %v435, %v439
        %v442 = vshll.u32 %v359, 16
        %v444 = vrot.slane %v442, 1
        %v445 = vsel %vm361, %v440, %v444
        %v447 = vshrl.u32 %v336, 16
        %v449 = vshll.u32 %v336, 16
        %v451 = vrot.slane %v449, 1
        %v452 = vor.u32 %v447, %v451
        %v454 = vshll.u32 %v360, 16
        %v456 = vrot.slane %v454, 1
        %v457 = vsel %vm361, %v452, %v456
        %458 = vrot.lane.b32.xlu0 %v373, 4
        %v459 = vpop.permute.xlu0 %458
        %460 = vrot.lane.b32.xlu0 %v385, 4
        %v461 = vpop.permute.xlu0 %460
        %462 = vrot.lane.b32.xlu0 %v397, 4
        %v463 = vpop.permute.xlu0 %462
        %464 = vrot.lane.b32.xlu0 %v409, 4
        %v465 = vpop.permute.xlu0 %464
        %466 = vrot.lane.b32.xlu0 %v421, 4
        %v467 = vpop.permute.xlu0 %466
        %468 = vrot.lane.b32.xlu0 %v433, 4
        %v469 = vpop.permute.xlu0 %468
        %470 = vrot.lane.b32.xlu0 %v445, 4
        %v471 = vpop.permute.xlu0 %470
        %472 = vrot.lane.b32.xlu0 %v457, 4
        %v473 = vpop.permute.xlu0 %472
        %v482 = vunpack.c.l.b16 %v223
        %v483 = vunpack.c.l.b16 %v224
        %v484 = vunpack.c.l.b16 %v225
        %v485 = vunpack.c.l.b16 %v226
        %v486 = vunpack.c.l.b16 %v227
        %v487 = vunpack.c.l.b16 %v228
        %v488 = vunpack.c.l.b16 %v229
        %v489 = vunpack.c.l.b16 %v230
        %v490 = vpack.c.b16 %v314, %v482
        %v491 = vpack.c.b16 %v316, %v483
        %v492 = vpack.c.b16 %v318, %v484
        %v493 = vpack.c.b16 %v320, %v485
        %v494 = vpack.c.b16 %v322, %v486
        %v495 = vpack.c.b16 %v324, %v487
        %v496 = vpack.c.b16 %v326, %v488
        %v497 = vpack.c.b16 %v328, %v489
        %vm498 = vcmask 1046528
        %v499 = vrot.slane %v490, 1
        %v500 = vrot.slane %v353, 1
        %v501 = vsel %vm498, %v499, %v500
        %v502 = vrot.slane %v491, 1
        %v503 = vrot.slane %v354, 1
        %v504 = vsel %vm498, %v502, %v503
        %v505 = vrot.slane %v492, 1
        %v506 = vrot.slane %v355, 1
        %v507 = vsel %vm498, %v505, %v506
        %v508 = vrot.slane %v493, 1
        %v509 = vrot.slane %v356, 1
        %v510 = vsel %vm498, %v508, %v509
        %v511 = vrot.slane %v494, 1
        %v512 = vrot.slane %v357, 1
        %v513 = vsel %vm498, %v511, %v512
        %v514 = vrot.slane %v495, 1
        %v515 = vrot.slane %v358, 1
        %v516 = vsel %vm498, %v514, %v515
        %v517 = vrot.slane %v496, 1
        %v518 = vrot.slane %v359, 1
        %v519 = vsel %vm498, %v517, %v518
        %v520 = vrot.slane %v497, 1
        %v521 = vrot.slane %v360, 1
        %v522 = vsel %vm498, %v520, %v521
        %523 = vrot.lane.b32.xlu0 %v501, 8
        %v524 = vpop.permute.xlu0 %523
        %525 = vrot.lane.b32.xlu0 %v504, 8
        %v526 = vpop.permute.xlu0 %525
        %527 = vrot.lane.b32.xlu0 %v507, 8
        %v528 = vpop.permute.xlu0 %527
        %529 = vrot.lane.b32.xlu0 %v510, 8
        %v530 = vpop.permute.xlu0 %529
        %531 = vrot.lane.b32.xlu0 %v513, 8
        %v532 = vpop.permute.xlu0 %531
        %533 = vrot.lane.b32.xlu0 %v516, 8
        %v534 = vpop.permute.xlu0 %533
        %535 = vrot.lane.b32.xlu0 %v519, 8
        %v536 = vpop.permute.xlu0 %535
        %537 = vrot.lane.b32.xlu0 %v522, 8
        %v538 = vpop.permute.xlu0 %537
        %v555 = vunpack.c.l.b16 %v232
        %v556 = vunpack.c.l.b16 %v233
        %v557 = vunpack.c.l.b16 %v234
        %v558 = vunpack.c.l.b16 %v235
        %v559 = vunpack.c.l.b16 %v236
        %v560 = vunpack.c.l.b16 %v237
        %v561 = vunpack.c.l.b16 %v238
        %v562 = vunpack.c.l.b16 %v239
        %v563 = vunpack.c.l.b16 %v240
        %v564 = vunpack.c.l.b16 %v241
        %v565 = vunpack.c.l.b16 %v242
        %v566 = vunpack.c.l.b16 %v243
        %v567 = vunpack.c.l.b16 %v244
        %v568 = vunpack.c.l.b16 %v245
        %v569 = vunpack.c.l.b16 %v246
        %v570 = vunpack.c.l.b16 %v247
        %v571 = vpack.c.b16 %v556, %v555
        %v572 = vpack.c.b16 %v558, %v557
        %v573 = vpack.c.b16 %v560, %v559
        %v574 = vpack.c.b16 %v562, %v561
        %v575 = vpack.c.b16 %v564, %v563
        %v576 = vpack.c.b16 %v566, %v565
        %v577 = vpack.c.b16 %v568, %v567
        %v578 = vpack.c.b16 %v570, %v569
        %579 = vrot.lane.b32.xlu0 %v571, 12
        %v580 = vpop.permute.xlu0 %579
        %581 = vrot.lane.b32.xlu0 %v572, 12
        %v582 = vpop.permute.xlu0 %581
        %583 = vrot.lane.b32.xlu0 %v573, 12
        %v584 = vpop.permute.xlu0 %583
        %585 = vrot.lane.b32.xlu0 %v574, 12
        %v586 = vpop.permute.xlu0 %585
        %587 = vrot.lane.b32.xlu0 %v575, 12
        %v588 = vpop.permute.xlu0 %587
        %589 = vrot.lane.b32.xlu0 %v576, 12
        %v590 = vpop.permute.xlu0 %589
        %591 = vrot.lane.b32.xlu0 %v577, 12
        %v592 = vpop.permute.xlu0 %591
        %593 = vrot.lane.b32.xlu0 %v578, 12
        %v594 = vpop.permute.xlu0 %593
        %v603 = vunpack.c.l.b16 %v248
        %v604 = vunpack.c.l.b16 %v249
        %v605 = vunpack.c.l.b16 %v250
        %v606 = vunpack.c.l.b16 %v251
        %v607 = vunpack.c.l.b16 %v252
        %v608 = vunpack.c.l.b16 %v253
        %v609 = vunpack.c.l.b16 %v254
        %v610 = vunpack.c.l.b16 %v255
        %v611 = vpack.c.b16 %v603, %v603
        %v612 = vpack.c.b16 %v604, %v604
        %v613 = vpack.c.b16 %v605, %v605
        %v614 = vpack.c.b16 %v606, %v606
        %v615 = vpack.c.b16 %v607, %v607
        %v616 = vpack.c.b16 %v608, %v608
        %v617 = vpack.c.b16 %v609, %v609
        %v618 = vpack.c.b16 %v610, %v610
        %v620 = vshrl.u32 %v571, 16
        %v622 = vshll.u32 %v571, 16
        %v624 = vrot.slane %v622, 1
        %v625 = vor.u32 %v620, %v624
        %v627 = vshll.u32 %v611, 16
        %v629 = vrot.slane %v627, 1
        %v630 = vsel %vm361, %v625, %v629
        %v632 = vshrl.u32 %v572, 16
        %v634 = vshll.u32 %v572, 16
        %v636 = vrot.slane %v634, 1
        %v637 = vor.u32 %v632, %v636
        %v639 = vshll.u32 %v612, 16
        %v641 = vrot.slane %v639, 1
        %v642 = vsel %vm361, %v637, %v641
        %v644 = vshrl.u32 %v573, 16
        %v646 = vshll.u32 %v573, 16
        %v648 = vrot.slane %v646, 1
        %v649 = vor.u32 %v644, %v648
        %v651 = vshll.u32 %v613, 16
        %v653 = vrot.slane %v651, 1
        %v654 = vsel %vm361, %v649, %v653
        %v656 = vshrl.u32 %v574, 16
        %v658 = vshll.u32 %v574, 16
        %v660 = vrot.slane %v658, 1
        %v661 = vor.u32 %v656, %v660
        %v663 = vshll.u32 %v614, 16
        %v665 = vrot.slane %v663, 1
        %v666 = vsel %vm361, %v661, %v665
        %v668 = vshrl.u32 %v575, 16
        %v670 = vshll.u32 %v575, 16
        %v672 = vrot.slane %v670, 1
        %v673 = vor.u32 %v668, %v672
        %v675 = vshll.u32 %v615, 16
        %v677 = vrot.slane %v675, 1
        %v678 = vsel %vm361, %v673, %v677
        %v680 = vshrl.u32 %v576, 16
        %v682 = vshll.u32 %v576, 16
        %v684 = vrot.slane %v682, 1
        %v685 = vor.u32 %v680, %v684
        %v687 = vshll.u32 %v616, 16
        %v689 = vrot.slane %v687, 1
        %v690 = vsel %vm361, %v685, %v689
        %v692 = vshrl.u32 %v577, 16
        %v694 = vshll.u32 %v577, 16
        %v696 = vrot.slane %v694, 1
        %v697 = vor.u32 %v692, %v696
        %v699 = vshll.u32 %v617, 16
        %v701 = vrot.slane %v699, 1
        %v702 = vsel %vm361, %v697, %v701
        %v704 = vshrl.u32 %v578, 16
        %v706 = vshll.u32 %v578, 16
        %v708 = vrot.slane %v706, 1
        %v709 = vor.u32 %v704, %v708
        %v711 = vshll.u32 %v618, 16
        %v713 = vrot.slane %v711, 1
        %v714 = vsel %vm361, %v709, %v713
        %715 = vrot.lane.b32.xlu0 %v630, 16
        %v716 = vpop.permute.xlu0 %715
        %717 = vrot.lane.b32.xlu0 %v642, 16
        %v718 = vpop.permute.xlu0 %717
        %719 = vrot.lane.b32.xlu0 %v654, 16
        %v720 = vpop.permute.xlu0 %719
        %721 = vrot.lane.b32.xlu0 %v666, 16
        %v722 = vpop.permute.xlu0 %721
        %723 = vrot.lane.b32.xlu0 %v678, 16
        %v724 = vpop.permute.xlu0 %723
        %725 = vrot.lane.b32.xlu0 %v690, 16
        %v726 = vpop.permute.xlu0 %725
        %727 = vrot.lane.b32.xlu0 %v702, 16
        %v728 = vpop.permute.xlu0 %727
        %729 = vrot.lane.b32.xlu0 %v714, 16
        %v730 = vpop.permute.xlu0 %729
        %v739 = vunpack.c.l.b16 %v256
        %v740 = vunpack.c.l.b16 %v257
        %v741 = vunpack.c.l.b16 %v258
        %v742 = vunpack.c.l.b16 %v259
        %v743 = vunpack.c.l.b16 %v260
        %v744 = vunpack.c.l.b16 %v261
        %v745 = vunpack.c.l.b16 %v262
        %v746 = vunpack.c.l.b16 %v263
        %v747 = vpack.c.b16 %v556, %v739
        %v748 = vpack.c.b16 %v558, %v740
        %v749 = vpack.c.b16 %v560, %v741
        %v750 = vpack.c.b16 %v562, %v742
        %v751 = vpack.c.b16 %v564, %v743
        %v752 = vpack.c.b16 %v566, %v744
        %v753 = vpack.c.b16 %v568, %v745
        %v754 = vpack.c.b16 %v570, %v746
        %v755 = vrot.slane %v747, 1
        %v756 = vrot.slane %v611, 1
        %v757 = vsel %vm498, %v755, %v756
        %v758 = vrot.slane %v748, 1
        %v759 = vrot.slane %v612, 1
        %v760 = vsel %vm498, %v758, %v759
        %v761 = vrot.slane %v749, 1
        %v762 = vrot.slane %v613, 1
        %v763 = vsel %vm498, %v761, %v762
        %v764 = vrot.slane %v750, 1
        %v765 = vrot.slane %v614, 1
        %v766 = vsel %vm498, %v764, %v765
        %v767 = vrot.slane %v751, 1
        %v768 = vrot.slane %v615, 1
        %v769 = vsel %vm498, %v767, %v768
        %v770 = vrot.slane %v752, 1
        %v771 = vrot.slane %v616, 1
        %v772 = vsel %vm498, %v770, %v771
        %v773 = vrot.slane %v753, 1
        %v774 = vrot.slane %v617, 1
        %v775 = vsel %vm498, %v773, %v774
        %v776 = vrot.slane %v754, 1
        %v777 = vrot.slane %v618, 1
        %v778 = vsel %vm498, %v776, %v777
        %779 = vrot.lane.b32.xlu0 %v757, 20
        %v780 = vpop.permute.xlu0 %779
        %781 = vrot.lane.b32.xlu0 %v760, 20
        %v782 = vpop.permute.xlu0 %781
        %783 = vrot.lane.b32.xlu0 %v763, 20
        %v784 = vpop.permute.xlu0 %783
        %785 = vrot.lane.b32.xlu0 %v766, 20
        %v786 = vpop.permute.xlu0 %785
        %787 = vrot.lane.b32.xlu0 %v769, 20
        %v788 = vpop.permute.xlu0 %787
        %789 = vrot.lane.b32.xlu0 %v772, 20
        %v790 = vpop.permute.xlu0 %789
        %791 = vrot.lane.b32.xlu0 %v775, 20
        %v792 = vpop.permute.xlu0 %791
        %793 = vrot.lane.b32.xlu0 %v778, 20
        %v794 = vpop.permute.xlu0 %793
        %v811 = vunpack.c.l.b16 %v265
        %v812 = vunpack.c.l.b16 %v266
        %v813 = vunpack.c.l.b16 %v267
        %v814 = vunpack.c.l.b16 %v268
        %v815 = vunpack.c.l.b16 %v269
        %v816 = vunpack.c.l.b16 %v270
        %v817 = vunpack.c.l.b16 %v271
        %v818 = vunpack.c.l.b16 %v272
        %v819 = vunpack.c.l.b16 %v273
        %v820 = vunpack.c.l.b16 %v274
        %v821 = vunpack.c.l.b16 %v275
        %v822 = vunpack.c.l.b16 %v276
        %v823 = vunpack.c.l.b16 %v277
        %v824 = vunpack.c.l.b16 %v278
        %v825 = vunpack.c.l.b16 %v279
        %v826 = vunpack.c.l.b16 %v280
        %v827 = vpack.c.b16 %v812, %v811
        %v828 = vpack.c.b16 %v814, %v813
        %v829 = vpack.c.b16 %v816, %v815
        %v830 = vpack.c.b16 %v818, %v817
        %v831 = vpack.c.b16 %v820, %v819
        %v832 = vpack.c.b16 %v822, %v821
        %v833 = vpack.c.b16 %v824, %v823
        %v834 = vpack.c.b16 %v826, %v825
        %835 = vrot.lane.b32.xlu0 %v827, 24
        %v836 = vpop.permute.xlu0 %835
        %837 = vrot.lane.b32.xlu0 %v828, 24
        %v838 = vpop.permute.xlu0 %837
        %839 = vrot.lane.b32.xlu0 %v829, 24
        %v840 = vpop.permute.xlu0 %839
        %841 = vrot.lane.b32.xlu0 %v830, 24
        %v842 = vpop.permute.xlu0 %841
        %843 = vrot.lane.b32.xlu0 %v831, 24
        %v844 = vpop.permute.xlu0 %843
        %845 = vrot.lane.b32.xlu0 %v832, 24
        %v846 = vpop.permute.xlu0 %845
        %847 = vrot.lane.b32.xlu0 %v833, 24
        %v848 = vpop.permute.xlu0 %847
        %849 = vrot.lane.b32.xlu0 %v834, 24
        %v850 = vpop.permute.xlu0 %849
        %v859 = vunpack.c.l.b16 %v281
        %v860 = vunpack.c.l.b16 %v282
        %v861 = vunpack.c.l.b16 %v283
        %v862 = vunpack.c.l.b16 %v284
        %v863 = vunpack.c.l.b16 %v285
        %v864 = vunpack.c.l.b16 %v286
        %v865 = vunpack.c.l.b16 %v287
        %v866 = vunpack.c.l.b16 %v288
        %v867 = vpack.c.b16 %v859, %v859
        %v868 = vpack.c.b16 %v860, %v860
        %v869 = vpack.c.b16 %v861, %v861
        %v870 = vpack.c.b16 %v862, %v862
        %v871 = vpack.c.b16 %v863, %v863
        %v872 = vpack.c.b16 %v864, %v864
        %v873 = vpack.c.b16 %v865, %v865
        %v874 = vpack.c.b16 %v866, %v866
        %v876 = vshrl.u32 %v827, 16
        %v878 = vshll.u32 %v827, 16
        %v880 = vrot.slane %v878, 1
        %v881 = vor.u32 %v876, %v880
        %v883 = vshll.u32 %v867, 16
        %v885 = vrot.slane %v883, 1
        %v886 = vsel %vm361, %v881, %v885
        %v888 = vshrl.u32 %v828, 16
        %v890 = vshll.u32 %v828, 16
        %v892 = vrot.slane %v890, 1
        %v893 = vor.u32 %v888, %v892
        %v895 = vshll.u32 %v868, 16
        %v897 = vrot.slane %v895, 1
        %v898 = vsel %vm361, %v893, %v897
        %v900 = vshrl.u32 %v829, 16
        %v902 = vshll.u32 %v829, 16
        %v904 = vrot.slane %v902, 1
        %v905 = vor.u32 %v900, %v904
        %v907 = vshll.u32 %v869, 16
        %v909 = vrot.slane %v907, 1
        %v910 = vsel %vm361, %v905, %v909
        %v912 = vshrl.u32 %v830, 16
        %v914 = vshll.u32 %v830, 16
        %v916 = vrot.slane %v914, 1
        %v917 = vor.u32 %v912, %v916
        %v919 = vshll.u32 %v870, 16
        %v921 = vrot.slane %v919, 1
        %v922 = vsel %vm361, %v917, %v921
        %v924 = vshrl.u32 %v831, 16
        %v926 = vshll.u32 %v831, 16
        %v928 = vrot.slane %v926, 1
        %v929 = vor.u32 %v924, %v928
        %v931 = vshll.u32 %v871, 16
        %v933 = vrot.slane %v931, 1
        %v934 = vsel %vm361, %v929, %v933
        %v936 = vshrl.u32 %v832, 16
        %v938 = vshll.u32 %v832, 16
        %v940 = vrot.slane %v938, 1
        %v941 = vor.u32 %v936, %v940
        %v943 = vshll.u32 %v872, 16
        %v945 = vrot.slane %v943, 1
        %v946 = vsel %vm361, %v941, %v945
        %v948 = vshrl.u32 %v833, 16
        %v950 = vshll.u32 %v833, 16
        %v952 = vrot.slane %v950, 1
        %v953 = vor.u32 %v948, %v952
        %v955 = vshll.u32 %v873, 16
        %v957 = vrot.slane %v955, 1
        %v958 = vsel %vm361, %v953, %v957
        %v960 = vshrl.u32 %v834, 16
        %v962 = vshll.u32 %v834, 16
        %v964 = vrot.slane %v962, 1
        %v965 = vor.u32 %v960, %v964
        %v967 = vshll.u32 %v874, 16
        %v969 = vrot.slane %v967, 1
        %v970 = vsel %vm361, %v965, %v969
        %971 = vrot.lane.b32.xlu0 %v886, 28
        %v972 = vpop.permute.xlu0 %971
        %973 = vrot.lane.b32.xlu0 %v898, 28
        %v974 = vpop.permute.xlu0 %973
        %975 = vrot.lane.b32.xlu0 %v910, 28
        %v976 = vpop.permute.xlu0 %975
        %977 = vrot.lane.b32.xlu0 %v922, 28
        %v978 = vpop.permute.xlu0 %977
        %979 = vrot.lane.b32.xlu0 %v934, 28
        %v980 = vpop.permute.xlu0 %979
        %981 = vrot.lane.b32.xlu0 %v946, 28
        %v982 = vpop.permute.xlu0 %981
        %983 = vrot.lane.b32.xlu0 %v958, 28
        %v984 = vpop.permute.xlu0 %983
        %985 = vrot.lane.b32.xlu0 %v970, 28
        %v986 = vpop.permute.xlu0 %985
        %v995 = vunpack.c.l.b16 %v289
        %v996 = vunpack.c.l.b16 %v290
        %v997 = vunpack.c.l.b16 %v291
        %v998 = vunpack.c.l.b16 %v292
        %v999 = vunpack.c.l.b16 %v293
        %v1000 = vunpack.c.l.b16 %v294
        %v1001 = vunpack.c.l.b16 %v295
        %v1002 = vunpack.c.l.b16 %v296
        %v1003 = vpack.c.b16 %v812, %v995
        %v1004 = vpack.c.b16 %v814, %v996
        %v1005 = vpack.c.b16 %v816, %v997
        %v1006 = vpack.c.b16 %v818, %v998
        %v1007 = vpack.c.b16 %v820, %v999
        %v1008 = vpack.c.b16 %v822, %v1000
        %v1009 = vpack.c.b16 %v824, %v1001
        %v1010 = vpack.c.b16 %v826, %v1002
        %v1011 = vrot.slane %v1003, 1
        %v1012 = vrot.slane %v867, 1
        %v1013 = vsel %vm498, %v1011, %v1012
        %v1014 = vrot.slane %v1004, 1
        %v1015 = vrot.slane %v868, 1
        %v1016 = vsel %vm498, %v1014, %v1015
        %v1017 = vrot.slane %v1005, 1
        %v1018 = vrot.slane %v869, 1
        %v1019 = vsel %vm498, %v1017, %v1018
        %v1020 = vrot.slane %v1006, 1
        %v1021 = vrot.slane %v870, 1
        %v1022 = vsel %vm498, %v1020, %v1021
        %v1023 = vrot.slane %v1007, 1
        %v1024 = vrot.slane %v871, 1
        %v1025 = vsel %vm498, %v1023, %v1024
        %v1026 = vrot.slane %v1008, 1
        %v1027 = vrot.slane %v872, 1
        %v1028 = vsel %vm498, %v1026, %v1027
        %v1029 = vrot.slane %v1009, 1
        %v1030 = vrot.slane %v873, 1
        %v1031 = vsel %vm498, %v1029, %v1030
        %v1032 = vrot.slane %v1010, 1
        %v1033 = vrot.slane %v874, 1
        %v1034 = vsel %vm498, %v1032, %v1033
        %1035 = vrot.lane.b32.xlu0 %v1013, 32
        %v1036 = vpop.permute.xlu0 %1035
        %1037 = vrot.lane.b32.xlu0 %v1016, 32
        %v1038 = vpop.permute.xlu0 %1037
        %1039 = vrot.lane.b32.xlu0 %v1019, 32
        %v1040 = vpop.permute.xlu0 %1039
        %1041 = vrot.lane.b32.xlu0 %v1022, 32
        %v1042 = vpop.permute.xlu0 %1041
        %1043 = vrot.lane.b32.xlu0 %v1025, 32
        %v1044 = vpop.permute.xlu0 %1043
        %1045 = vrot.lane.b32.xlu0 %v1028, 32
        %v1046 = vpop.permute.xlu0 %1045
        %1047 = vrot.lane.b32.xlu0 %v1031, 32
        %v1048 = vpop.permute.xlu0 %1047
        %1049 = vrot.lane.b32.xlu0 %v1034, 32
        %v1050 = vpop.permute.xlu0 %1049
        %vm1051 = vcmask 31744
        %v1053 = vsel %vm1051, %v329, %v459
        %v1055 = vsel %vm1051, %v330, %v461
        %v1057 = vsel %vm1051, %v331, %v463
        %v1059 = vsel %vm1051, %v332, %v465
        %v1061 = vsel %vm1051, %v333, %v467
        %v1063 = vsel %vm1051, %v334, %v469
        %v1065 = vsel %vm1051, %v335, %v471
        %v1067 = vsel %vm1051, %v336, %v473
        %vm1068 = vcmask 64512
        %v1070 = vsel %vm1068, %v1053, %v524
        %v1072 = vsel %vm1068, %v1055, %v526
        %v1074 = vsel %vm1068, %v1057, %v528
        %v1076 = vsel %vm1068, %v1059, %v530
        %v1078 = vsel %vm1068, %v1061, %v532
        %v1080 = vsel %vm1068, %v1063, %v534
        %v1082 = vsel %vm1068, %v1065, %v536
        %v1084 = vsel %vm1068, %v1067, %v538
        %vm1085 = vcmask 97280
        %v1087 = vsel %vm1085, %v1070, %v580
        %v1089 = vsel %vm1085, %v1072, %v582
        %v1091 = vsel %vm1085, %v1074, %v584
        %v1093 = vsel %vm1085, %v1076, %v586
        %v1095 = vsel %vm1085, %v1078, %v588
        %v1097 = vsel %vm1085, %v1080, %v590
        %v1099 = vsel %vm1085, %v1082, %v592
        %v1101 = vsel %vm1085, %v1084, %v594
        %vm1102 = vcmask 130048
        %v1104 = vsel %vm1102, %v1087, %v716
        %v1106 = vsel %vm1102, %v1089, %v718
        %v1108 = vsel %vm1102, %v1091, %v720
        %v1110 = vsel %vm1102, %v1093, %v722
        %v1112 = vsel %vm1102, %v1095, %v724
        %v1114 = vsel %vm1102, %v1097, %v726
        %v1116 = vsel %vm1102, %v1099, %v728
        %v1118 = vsel %vm1102, %v1101, %v730
        %vm1119 = vcmask 162816
        %v1121 = vsel %vm1119, %v1104, %v780
        %v1123 = vsel %vm1119, %v1106, %v782
        %v1125 = vsel %vm1119, %v1108, %v784
        %v1127 = vsel %vm1119, %v1110, %v786
        %v1129 = vsel %vm1119, %v1112, %v788
        %v1131 = vsel %vm1119, %v1114, %v790
        %v1133 = vsel %vm1119, %v1116, %v792
        %v1135 = vsel %vm1119, %v1118, %v794
        %vm1136 = vcmask 195584
        %v1138 = vsel %vm1136, %v1121, %v836
        %v1140 = vsel %vm1136, %v1123, %v838
        %v1142 = vsel %vm1136, %v1125, %v840
        %v1144 = vsel %vm1136, %v1127, %v842
        %v1146 = vsel %vm1136, %v1129, %v844
        %v1148 = vsel %vm1136, %v1131, %v846
        %v1150 = vsel %vm1136, %v1133, %v848
        %v1152 = vsel %vm1136, %v1135, %v850
        %vm1153 = vcmask 228352
        %v1155 = vsel %vm1153, %v1138, %v972
        %v1157 = vsel %vm1153, %v1140, %v974
        %v1159 = vsel %vm1153, %v1142, %v976
        %v1161 = vsel %vm1153, %v1144, %v978
        %v1163 = vsel %vm1153, %v1146, %v980
        %v1165 = vsel %vm1153, %v1148, %v982
        %v1167 = vsel %vm1153, %v1150, %v984
        %v1169 = vsel %vm1153, %v1152, %v986
        %vm1170 = vcmask 261120
        %v1172 = vsel %vm1170, %v1155, %v1036
        %v1174 = vsel %vm1170, %v1157, %v1038
        %v1176 = vsel %vm1170, %v1159, %v1040
        %v1178 = vsel %vm1170, %v1161, %v1042
        %v1180 = vsel %vm1170, %v1163, %v1044
        %v1182 = vsel %vm1170, %v1165, %v1046
        %v1184 = vsel %vm1170, %v1167, %v1048
        %v1186 = vsel %vm1170, %v1169, %v1050
        %v1187 = vld [vmem:[%s1] sm:$0xf]
        %v1188 = vld [vmem:[%s1 + $0x4] sm:$0xf]
        %v1189 = vld [vmem:[%s1 + $0x8] sm:$0xf]
        %v1190 = vld [vmem:[%s1 + $0xc] sm:$0xf]
        %v1191 = vld [vmem:[%s1 + $0x10] sm:$0x3]
        %v1192 = vld [vmem:[%s2] sm:$0x1]
        %v1194 = vlaneseq
        %v1195 = vshrl.u32 %v1194, 7
        %v1196 = vsub.s32 0, %v1195
        %v1197 = vrot.slane %v1192, %v1196
        %v1204 = vunpack.c.l.b16 %v1187
        %v1205 = vunpack.c.l.b16 %v1188
        %v1206 = vunpack.c.l.b16 %v1189
        %v1207 = vunpack.c.l.b16 %v1190
        %v1208 = vunpack.c.l.b16 %v1191
        %v1209 = vpack.c.b16 %v1205, %v1204
        %v1210 = vpack.c.b16 %v1207, %v1206
        %v1211 = vpack.c.b16 %v1208, %v1208
        %vm1214 = vcmask 293888
        %v1215 = vsel %vm1214, %v1172, 0
        %v1217 = vsel %vm1214, %v1174, 0
        %v1219 = vsel %vm1214, %v1176, 0
        %v1221 = vsel %vm1214, %v1178, 0
        %v1223 = vsel %vm1214, %v1180, 0
        %v1225 = vsel %vm1214, %v1182, 0
        %v1227 = vsel %vm1214, %v1184, 0
        %v1229 = vsel %vm1214, %v1186, 0
        %vm1231 = vcmask 1041408
        %v1233 = vsel %vm1231, %v1211, 0
        %1235 = vmatprep.subr.bf16.mxu0 0
        %1236 = vmatpush1.bf16.msra.mxu0 %v1209
        %1237 = vmatprep.subr.bf16.mxu0 0
        %1238 = vmatpush1.bf16.msra.mxu0 %v1210
        %1239 = vmatprep.subr.bf16.mxu0 0
        %1240 = vmatpush1.bf16.msra.mxu0 %v1233
        %1241 = vmatprep.subr.bf16.mxu0 0
        %1242 = vmatpush1.bf16.msra.mxu0 0
        %1243 = vmatprep.subr.bf16.mxu0 0
        %1244 = vmatpush1.bf16.msra.mxu0 0
        %1245 = vmatprep.subr.bf16.mxu0 0
        %1246 = vmatpush1.bf16.msra.mxu0 0
        %1247 = vmatprep.subr.bf16.mxu0 0
        %1248 = vmatpush1.bf16.msra.mxu0 0
        %1249 = vmatprep.subr.bf16.mxu0 0
        %1250 = vmatpush1.bf16.msra.mxu0 0
        %1251 = vmatprep.subr.bf16.mxu0 0
        %1252 = vmatpush1.bf16.msra.mxu0 0
        %1253 = vmatprep.subr.bf16.mxu0 0
        %1254 = vmatpush1.bf16.msra.mxu0 0
        %1255 = vmatprep.subr.bf16.mxu0 0
        %1256 = vmatpush1.bf16.msra.mxu0 0
        %1257 = vmatprep.subr.bf16.mxu0 0
        %1258 = vmatpush1.bf16.msra.mxu0 0
        %1259 = vmatprep.subr.bf16.mxu0 0
        %1260 = vmatpush1.bf16.msra.mxu0 0
        %1261 = vmatprep.subr.bf16.mxu0 0
        %1262 = vmatpush1.bf16.msra.mxu0 0
        %1263 = vmatprep.subr.bf16.mxu0 0
        %1264 = vmatpush1.bf16.msra.mxu0 0
        %1265 = vmatprep.subr.bf16.mxu0 0
        %1266 = vmatpush1.bf16.msra.mxu0 0
        %1267 = vmatprep.mubr.bf16.mxu0 0
        %1268 = vmatmul.mubr.bf16.gmra.mrb[0].mxu0 %v1215
        %v1269 = vpop.f32.mrb[0].mxu0
        %v1270 = vadd.f32 %v1197, %v1269
        %v1271 = vpop.f32.mrb[0].mxu0
        %v1272 = vpop.f32.mrb[0].mxu0
        %v1273 = vadd.f32 %v1197, %v1272
        %v1274 = vpop.f32.mrb[0].mxu0
        %1275 = vmatprep.mubr.bf16.mxu0 0
        %1276 = vmatmul.mubr.bf16.gmra.mrb[0].mxu0 %v1217
        %v1277 = vpop.f32.mrb[0].mxu0
        %v1278 = vadd.f32 %v1197, %v1277
        %v1279 = vpop.f32.mrb[0].mxu0
        %v1280 = vpop.f32.mrb[0].mxu0
        %v1281 = vadd.f32 %v1197, %v1280
        %v1282 = vpop.f32.mrb[0].mxu0
        %1283 = vmatprep.mubr.bf16.mxu0 0
        %1284 = vmatmul.mubr.bf16.gmra.mrb[0].mxu0 %v1219
        %v1285 = vpop.f32.mrb[0].mxu0
        %v1286 = vadd.f32 %v1197, %v1285
        %v1287 = vpop.f32.mrb[0].mxu0
        %v1288 = vpop.f32.mrb[0].mxu0
        %v1289 = vadd.f32 %v1197, %v1288
        %v1290 = vpop.f32.mrb[0].mxu0
        %1291 = vmatprep.mubr.bf16.mxu0 0
        %1292 = vmatmul.mubr.bf16.gmra.mrb[0].mxu0 %v1221
        %v1293 = vpop.f32.mrb[0].mxu0
        %v1294 = vadd.f32 %v1197, %v1293
        %v1295 = vpop.f32.mrb[0].mxu0
        %v1296 = vpop.f32.mrb[0].mxu0
        %v1297 = vadd.f32 %v1197, %v1296
        %v1298 = vpop.f32.mrb[0].mxu0
        %1299 = vmatprep.mubr.bf16.mxu0 0
        %1300 = vmatmul.mubr.bf16.gmra.mrb[0].mxu0 %v1223
        %v1301 = vpop.f32.mrb[0].mxu0
        %v1302 = vadd.f32 %v1197, %v1301
        %v1303 = vpop.f32.mrb[0].mxu0
        %v1304 = vpop.f32.mrb[0].mxu0
        %v1305 = vadd.f32 %v1197, %v1304
        %v1306 = vpop.f32.mrb[0].mxu0
        %1307 = vmatprep.mubr.bf16.mxu0 0
        %1308 = vmatmul.mubr.bf16.gmra.mrb[0].mxu0 %v1225
        %v1309 = vpop.f32.mrb[0].mxu0
        %v1310 = vadd.f32 %v1197, %v1309
        %v1311 = vpop.f32.mrb[0].mxu0
        %v1312 = vpop.f32.mrb[0].mxu0
        %v1313 = vadd.f32 %v1197, %v1312
        %v1314 = vpop.f32.mrb[0].mxu0
        %1315 = vmatprep.mubr.bf16.mxu0 0
        %1316 = vmatmul.mubr.bf16.gmra.mrb[0].mxu0 %v1227
        %v1317 = vpop.f32.mrb[0].mxu0
        %v1318 = vadd.f32 %v1197, %v1317
        %v1319 = vpop.f32.mrb[0].mxu0
        %v1320 = vpop.f32.mrb[0].mxu0
        %v1321 = vadd.f32 %v1197, %v1320
        %v1322 = vpop.f32.mrb[0].mxu0
        %1323 = vmatprep.mubr.bf16.mxu0 0
        %1324 = vmatmul.mubr.bf16.gmra.mrb[0].mxu0 %v1229
        %v1325 = vpop.f32.mrb[0].mxu0
        %v1326 = vadd.f32 %v1197, %v1325
        %v1327 = vpop.f32.mrb[0].mxu0
        %v1328 = vpop.f32.mrb[0].mxu0
        %v1329 = vadd.f32 %v1197, %v1328
        %v1330 = vpop.f32.mrb[0].mxu0
        %1331 = vdwg.mxu0
        %1332 = vst [vmem:[%s187] sm:$0xff] %v1270
        %1333 = vst [vmem:[%s187 + $0x8] sm:$0xff] %v1273
        %1334 = vst [vmem:[%s187 + $0x10] sm:$0xff] %v1278
        %1335 = vst [vmem:[%s187 + $0x18] sm:$0xff] %v1281
        %1336 = vst [vmem:[%s187 + $0x20] sm:$0xff] %v1286
        %1337 = vst [vmem:[%s187 + $0x28] sm:$0xff] %v1289
        %1338 = vst [vmem:[%s187 + $0x30] sm:$0xff] %v1294
        %1339 = vst [vmem:[%s187 + $0x38] sm:$0xff] %v1297
        %1340 = vst [vmem:[%s187 + $0x40] sm:$0xff] %v1302
        %1341 = vst [vmem:[%s187 + $0x48] sm:$0xff] %v1305
        %1342 = vst [vmem:[%s187 + $0x50] sm:$0xff] %v1310
        %1343 = vst [vmem:[%s187 + $0x58] sm:$0xff] %v1313
        %1344 = vst [vmem:[%s187 + $0x60] sm:$0xff] %v1318
        %1345 = vst [vmem:[%s187 + $0x68] sm:$0xff] %v1321
        %1346 = vst [vmem:[%s187 + $0x70] sm:$0xff] %v1326
        %1347 = vst [vmem:[%s187 + $0x78] sm:$0xff] %v1329
        %s1348 = sand.u32 %s109, 1
        %s1349 = scalar_lea.sflag [#allocation3], %s1348
        %s1350 = sand.u32 %s109, 1
        %s1351 = smul.addr %s1350, 128
        %s1352 = scalar_lea.vmem [#allocation2], %s1351
        // Predicated region
        $region33: #{tpu_custom_call.1} parent=31 // pred_check
          %p1353 = pneg %p119
        $region34: #{tpu_custom_call.1} parent=31 // pred_check_branch
          %1355 = sbr.rel (%p1353) target = $region36
        $region35: #{tpu_custom_call.1} parent=31 // pred_region
          %s1356 = smul.u32 16, %s22
          %s1358 = ssub.s32 2048, 2048
          %1359 = vsyncadd %s1349, %s1358
          %s1360 = smul.addr %s21, 32
          %s1361 = sadd.s32 %s1356, %s1360
          %s1362 = smul.addr %s1361, 128
          %s1363 = scalar_lea.hbm %s3, %s1362
          %s1364 = sshll.u32 %s1352, 4
          %s1365 = int_to_ptr.vmem [resolvable:$true] %s1364
          %1370 = dma.vmem_to_hbm [thread:$0]  %s1365, 2048, %s1363, %s1349, 128, 128, 8
        $region36: #{tpu_custom_call.1} parent=31 // pred_fallthru
          _
      $region32: #{tpu_custom_call.1} parent=5 // pred_fallthru
        _
      %p1371 = scmp.le.s32.totalorder 2, %s12
      // Predicated region
      $region37: #{tpu_custom_call.1} parent=5 // pred_check
        %p1372 = pneg %p1371
      $region38: #{tpu_custom_call.1} parent=5 // pred_check_branch
        %1374 = sbr.rel (%p1372) target = $region40
      $region39: #{tpu_custom_call.1} parent=5 // pred_region
        %s1375 = ssub.s32 %s12, 2
        // Predicated region
        $region41: #{tpu_custom_call.1} parent=39 // pred_check
          %p1376 = pneg %p125
        $region42: #{tpu_custom_call.1} parent=39 // pred_check_branch
          %1378 = sbr.rel (%p1376) target = $region44
        $region43: #{tpu_custom_call.1} parent=39 // pred_region
          %s1379 = sand.u32 %s110, 1
          %s1380 = scalar_lea.sflag [#allocation3], %s1379
          %s1381 = sand.u32 %s110, 1
          %s1382 = smul.addr %s1381, 128
          %s1383 = scalar_lea.vmem [#allocation2], %s1382
          %1384 = dma.done %s1380, 2048
        $region44: #{tpu_custom_call.1} parent=39 // pred_fallthru
          _
      $region40: #{tpu_custom_call.1} parent=5 // pred_fallthru
        _
    $region6: #{tpu_custom_call.1} parent=1 // loop_footer
      %s16 = sadd.s32 1, %s12
    $region7: #{tpu_custom_call.1} parent=1 // loop_footer_branch
      %11 = sbr.rel target = $region3
    $region8: #{tpu_custom_call.1} parent=1 // loop_exit
      _
    %1385 = vsyncpa [#allocation3], 1
    %s1386 = scalar_lea.sflag [#allocation3], 1
    %1387 = vsyncpa %s1386, 1

</llo_original>
